<compile_context>
chip_gen: v7x
topology: tpu7x:2x2x1
jax: 0.10.0
libtpu: 0.0.40
codegen_flags: <defaults>
</compile_context>

<pallas_src>
import functools
from typing import NamedTuple, Optional

import jax
import jax.numpy as jnp
from jax.experimental import pallas as pl
from jax.experimental.pallas import tpu as pltpu


def _round_up(x: int, m: int) -> int:
    return (x + m - 1) // m * m


def _pick_tile(dim: int, target: int, gran: int, min_blocks: int = 1):
    """Pick (tile, padded_dim): tile is a multiple of `gran`, padded_dim % tile == 0,
    minimizing padded_dim (tie-break: larger tile).  `min_blocks` is best-effort."""
    dim_g = _round_up(max(int(dim), 1), gran)
    target = max(gran, min(_round_up(int(target), gran), dim_g))
    best_t, best_pad = gran, dim_g
    t = gran
    while t <= target:
        pad = _round_up(dim_g, t)
        if pad // t >= min_blocks:
            if pad < best_pad or (pad == best_pad and t > best_t):
                best_t, best_pad = t, pad
        t += gran
    return best_t, best_pad


def _phys_bytes(shape, dtype) -> int:
    """Physical VMEM footprint of a (..., r, c) buffer with (8*pack, 128) tiling."""
    itemsize = jnp.dtype(dtype).itemsize
    sub = 8 * max(1, 4 // itemsize)
    r = shape[-2] if len(shape) >= 2 else 1
    c = shape[-1]
    lead = 1
    for d in shape[:-2]:
        lead *= int(d)
    return lead * _round_up(int(r), sub) * _round_up(int(c), 128) * itemsize


def _vmem_cap_bytes() -> int:
    try:
        kind = jax.devices()[0].device_kind.lower()
    except Exception:
        kind = ""
    if "v7" in kind:
        return 48 * 1024 * 1024   # v7x: 64 MiB physical VMEM; leave compiler headroom
    return 100 * 1024 * 1024      # v5e / v6e: 128 MiB physical VMEM


class LoraLinearMeta(NamedTuple):
    """Static (hashable) layer metadata produced by prepare_lora_linear."""
    in_features: int
    out_features: int
    rank: int
    k_pad: int
    n_pad: int
    tk: int
    tn: int
    compute_dtype: str


def prepare_lora_linear(w_lin, w_down, w_up, scale, bias=None, *,
                        tn: int = 1024, tk: int = 1024, compute_dtype=None,
                        ensure_two_n_blocks: bool = True):
    """One-time weight preparation: transpose to MXU-friendly (K, N) layout, pad to
    the chosen tile sizes, cast to the compute dtype, and fold `scale` into W_up.

    Call once per layer (parameter-prep time); every forward then only moves
    x-sized data before the kernel.
    """
    out_f, in_f = w_lin.shape
    rank = w_down.shape[0]
    cdt = jnp.dtype(compute_dtype) if compute_dtype is not None else jnp.dtype(w_lin.dtype)

    tk_eff, k_pad = _pick_tile(in_f, tk, 128)
    # Prefer >= 2 blocks along N so v7x's 2nd TensorCore has work at small M.
    tn_eff, n_pad = _pick_tile(out_f, tn, 128,
                               min_blocks=2 if ensure_two_n_blocks else 1)

    scale_f = jnp.asarray(scale, jnp.float32)
    w_kn = jnp.pad(jnp.transpose(w_lin).astype(cdt),
                   ((0, k_pad - in_f), (0, n_pad - out_f)))              # (K_pad, N_pad)
    wu = jnp.pad(jnp.transpose(w_up).astype(jnp.float32) * scale_f,
                 ((0, 0), (0, n_pad - out_f)))                           # (rank, N_pad)
    wd_t = jnp.transpose(w_down).astype(jnp.float32)                     # (in_f, rank)
    b = (jnp.zeros((out_f,), jnp.float32) if bias is None
         else jnp.asarray(bias, jnp.float32))
    b = jnp.pad(b.reshape(1, out_f), ((0, 0), (0, n_pad - out_f)))       # (1, N_pad)

    params = {"w": w_kn, "wd_t": wd_t, "wu": wu, "b": b}
    meta = LoraLinearMeta(int(in_f), int(out_f), int(rank), int(k_pad), int(n_pad),
                          int(tk_eff), int(tn_eff), str(jnp.dtype(cdt)))
    return params, meta


def _lora_kernel_f32out(x_ref, w_ref, dn_ref, wu_ref, b_ref, o_ref):
    """f32 output: accumulate directly into the resident output block (no scratch)."""
    k = pl.program_id(2)

    @pl.when(k == 0)
    def _():
        o_ref[...] = jnp.zeros_like(o_ref)

    o_ref[...] += jnp.dot(x_ref[...], w_ref[...], preferred_element_type=jnp.float32)

    @pl.when(k == pl.num_programs(2) - 1)
    def _():
        dn = dn_ref[...]          # (tm, rank) f32
        wu = wu_ref[...]          # (rank, tn) f32 (scale already folded in)
        upd = b_ref[...]          # (1, tn)  -> broadcasts
        for r in range(dn.shape[-1]):       # static rank, unrolled VPU rank-1 updates
            upd = upd + dn[:, r:r + 1] * wu[r:r + 1, :]
        o_ref[...] += upd


def _lora_kernel_acc(x_ref, w_ref, dn_ref, wu_ref, b_ref, o_ref, acc_ref):
    """Generic output dtype: f32 VMEM accumulator, cast on finalize."""
    k = pl.program_id(2)

    @pl.when(k == 0)
    def _():
        acc_ref[...] = jnp.zeros_like(acc_ref)

    acc_ref[...] += jnp.dot(x_ref[...], w_ref[...], preferred_element_type=jnp.float32)

    @pl.when(k == pl.num_programs(2) - 1)
    def _():
        dn = dn_ref[...]
        wu = wu_ref[...]
        res = acc_ref[...] + b_ref[...]
        for r in range(dn.shape[-1]):       # unrolled VPU rank-1 updates
            res = res + dn[:, r:r + 1] * wu[r:r + 1, :]
        o_ref[...] = res.astype(o_ref.dtype)


@functools.partial(jax.jit, static_argnames=("meta", "tm"))
def lora_linear_apply(x, params, *, meta: LoraLinearMeta, tm: int = 512):
    """x: [..., in_features] -> [..., out_features] using prepared params/meta."""
    in_f, out_f, rank = meta.in_features, meta.out_features, meta.rank
    k_pad, n_pad, tk, tn = meta.k_pad, meta.n_pad, meta.tk, meta.tn
    cdt = jnp.dtype(meta.compute_dtype)
    out_dtype = x.dtype

    lead = x.shape[:-1]
    x2 = x.reshape(-1, in_f)
    M = x2.shape[0]

    # Rank-4 LoRA down projection hoisted out of the grid (tiny f32 matmul).
    down = jnp.dot(x2.astype(jnp.float32), params["wd_t"],
                   preferred_element_type=jnp.float32)                   # (M, rank)

    tm_eff, m_pad = _pick_tile(M, tm, 16)
    xk = jnp.pad(x2.astype(cdt), ((0, m_pad - M), (0, k_pad - in_f)))
    down = jnp.pad(down, ((0, m_pad - M), (0, 0)))

    grid = (m_pad // tm_eff, n_pad // tn, k_pad // tk)

    f32_out = out_dtype == jnp.float32
    kernel = _lora_kernel_f32out if f32_out else _lora_kernel_acc
    scratch = [] if f32_out else [pltpu.VMEM((tm_eff, tn), jnp.float32)]

    # VMEM footprint (double-buffered in/out + scratch), accounting for physical
    # (8/16, 128) tiling of the narrow rank-wide buffers.
    vmem_est = (
        2 * (_phys_bytes((tm_eff, tk), cdt)
             + _phys_bytes((tk, tn), cdt)
             + _phys_bytes((tm_eff, rank), jnp.float32)
             + _phys_bytes((rank, tn), jnp.float32)
             + _phys_bytes((1, tn), jnp.float32)
             + _phys_bytes((tm_eff, tn), out_dtype))
        + (0 if f32_out else _phys_bytes((tm_eff, tn), jnp.float32)))
    vmem_limit = int(min(max(vmem_est + (4 << 20), 16 << 20), _vmem_cap_bytes()))

    bytes_accessed = (
        xk.size * xk.dtype.itemsize * grid[1]                 # x re-read per N tile
        + params["w"].size * params["w"].dtype.itemsize * grid[0]
        + down.size * 4 * grid[1]
        + params["wu"].size * 4 + params["b"].size * 4
        + m_pad * n_pad * jnp.dtype(out_dtype).itemsize)
    cost = pl.CostEstimate(
        flops=2 * m_pad * k_pad * n_pad + 2 * m_pad * rank * n_pad,
        transcendentals=0,
        bytes_accessed=int(bytes_accessed))

    out = pl.pallas_call(
        kernel,
        out_shape=jax.ShapeDtypeStruct((m_pad, n_pad), out_dtype),
        grid_spec=pltpu.PrefetchScalarGridSpec(
            num_scalar_prefetch=0,
            grid=grid,
            in_specs=[
                pl.BlockSpec((tm_eff, tk), lambda i, j, k: (i, k)),    # x tile
                # If the W DMA is still exposed on v6e, add
                # pipeline_mode=pl.Buffered(3) here.
                pl.BlockSpec((tk, tn), lambda i, j, k: (k, j)),        # W (K, N)
                pl.BlockSpec((tm_eff, rank), lambda i, j, k: (i, 0)),  # x @ W_down^T
                pl.BlockSpec((rank, tn), lambda i, j, k: (0, j)),      # W_up^T * scale
                pl.BlockSpec((1, tn), lambda i, j, k: (0, j)),         # bias
            ],
            out_specs=pl.BlockSpec((tm_eff, tn), lambda i, j, k: (i, j)),
            scratch_shapes=scratch,
        ),
        compiler_params=pltpu.CompilerParams(
            dimension_semantics=("parallel", "parallel", "arbitrary"),
            vmem_limit_bytes=vmem_limit,
        ),
        cost_estimate=cost,
    )(xk, params["w"], down, params["wu"], params["b"])

    return out[:M, :out_f].reshape(*lead, out_f)


def lora_injected_linear(x, w_lin, w_down, w_up, scale, bias=None, *,
                         tm=512, tn=1024, tk=1024, compute_dtype=None):
    """Convenience one-shot wrapper (weight prep per call).  For repeated calls,
    use prepare_lora_linear once and lora_linear_apply per forward."""
    params, meta = prepare_lora_linear(w_lin, w_down, w_up, scale, bias,
                                       tn=tn, tk=tk, compute_dtype=compute_dtype)
    return lora_linear_apply(x, params, meta=meta, tm=tm)


if __name__ == "__main__":
    # Small shapes consistent with nn.Linear usage: (batch, seq, in_features).
    batch, seq, in_features, out_features = 2, 8, 32, 64

    key = jax.random.PRNGKey(0)
    kx, kw, kd, ku = jax.random.split(key, 4)

    x = jax.random.normal(kx, (batch, seq, in_features), dtype=jnp.float32)

    # Deterministic parameters (shapes per LoraInjectedLinear.__init__, bias=False).
    w_lin = jax.random.normal(kw, (out_features, in_features), jnp.float32) * (
        1.0 / jnp.sqrt(in_features * 1.0))
    w_down = jax.random.normal(kd, (4, in_features), jnp.float32) * (1.0 / 16.0)
    # __init__ zero-inits lora_up; use small random values so the LoRA path is
    # actually exercised / verifiable.
    w_up = jax.random.normal(ku, (out_features, 4), jnp.float32) * 0.01
    scale = jnp.float32(0.001)

    # Pure-JAX reference.
    ref = x @ w_lin.T + ((x @ w_down.T) @ w_up.T) * scale

    # f32 path (exact check) -- prepare weights once, apply.
    params_f32, meta_f32 = prepare_lora_linear(w_lin, w_down, w_up, scale)
    out = jax.block_until_ready(lora_linear_apply(x, params_f32, meta=meta_f32))
    assert out.shape == (batch, seq, out_features)
    assert jnp.allclose(out, ref, atol=1e-5, rtol=1e-5), "f32 mismatch vs reference"

    # bf16 compute + bf16 output path (exercises the f32-scratch kernel variant).
    params_bf, meta_bf = prepare_lora_linear(w_lin, w_down, w_up, scale,
                                             compute_dtype=jnp.bfloat16)
    out_bf = jax.block_until_ready(
        lora_linear_apply(x.astype(jnp.bfloat16), params_bf, meta=meta_bf))
    assert out_bf.dtype == jnp.bfloat16
    assert jnp.allclose(out_bf.astype(jnp.float32), ref, atol=5e-2, rtol=5e-2), (
        "bf16 mismatch vs reference")

    print("KERNEL_OK")
</pallas_src>

<mosaic_0001>
module attributes {stable_mosaic.version = 11 : i64} {
  func.func @_lora_kernel_f32out(%arg0: i32, %arg1: i32, %arg2: i32, %arg3: memref<16x128xf32, #tpu.memory_space<vmem>>, %arg4: memref<128x128xf32, #tpu.memory_space<vmem>>, %arg5: memref<16x4xf32, #tpu.memory_space<vmem>>, %arg6: memref<4x128xf32, #tpu.memory_space<vmem>>, %arg7: memref<1x128xf32, #tpu.memory_space<vmem>>, %arg8: memref<16x128xf32, #tpu.memory_space<vmem>>) attributes {dimension_semantics = [#tpu.dimension_semantics<parallel>, #tpu.dimension_semantics<parallel>, #tpu.dimension_semantics<arbitrary>], iteration_bounds = array<i64: 1, 1, 1>, scalar_prefetch = 0 : i64, scratch_operands = 0 : i64, tpu.core_type = #tpu.core_type<tc>, window_params = [{transform_indices = @transform_0, window_bounds = array<i64: 16, 128>}, {transform_indices = @transform_1, window_bounds = array<i64: 128, 128>}, {transform_indices = @transform_2, window_bounds = array<i64: 16, 4>}, {transform_indices = @transform_3, window_bounds = array<i64: 4, 128>}, {transform_indices = @transform_4, window_bounds = array<i64: 1, 128>}, {transform_indices = @transform_5, window_bounds = array<i64: 16, 128>}]} {
    %c0_i32 = arith.constant 0 : i32
    %0 = arith.cmpi eq, %arg2, %c0_i32 : i32
    %1 = arith.extui %0 : i1 to i32
    %c0_i32_0 = arith.constant 0 : i32
    %2 = arith.cmpi ne, %1, %c0_i32_0 : i32
    scf.if %2 {
      %cst_10 = arith.constant 0.000000e+00 : f32
      %12 = vector.broadcast %cst_10 : f32 to vector<16x128xf32>
      %c0_11 = arith.constant 0 : index
      %c0_12 = arith.constant 0 : index
      %13 = vector.load %arg8[%c0_11, %c0_12] : memref<16x128xf32, #tpu.memory_space<vmem>>, vector<16x128xf32>
      tpu.vector_store %arg8[%c0_11, %c0_12], %12 {strides = array<i32>} : memref<16x128xf32, #tpu.memory_space<vmem>>, vector<16x128xf32>,
    } else {
    }
    %c0 = arith.constant 0 : index
    %c0_1 = arith.constant 0 : index
    %3 = vector.load %arg8[%c0, %c0_1] : memref<16x128xf32, #tpu.memory_space<vmem>>, vector<16x128xf32>
    %c0_2 = arith.constant 0 : index
    %c0_3 = arith.constant 0 : index
    %4 = vector.load %arg3[%c0_2, %c0_3] : memref<16x128xf32, #tpu.memory_space<vmem>>, vector<16x128xf32>
    %c0_4 = arith.constant 0 : index
    %c0_5 = arith.constant 0 : index
    %5 = vector.load %arg4[%c0_4, %c0_5] : memref<128x128xf32, #tpu.memory_space<vmem>>, vector<128x128xf32>
    %cst = arith.constant dense<0.000000e+00> : vector<16x128xf32>
    %6 = tpu.matmul %4, %5, %cst {dimension_numbers = #tpu.dot_dimension_numbers<[1], [0], [0], [1], [0, 0, 1, 1], [], []>} : vector<16x128xf32>, vector<128x128xf32>, vector<16x128xf32> -> vector<16x128xf32>
    %7 = arith.addf %3, %6 : vector<16x128xf32>
    %c0_6 = arith.constant 0 : index
    %c0_7 = arith.constant 0 : index
    %8 = vector.load %arg8[%c0_6, %c0_7] : memref<16x128xf32, #tpu.memory_space<vmem>>, vector<16x128xf32>
    tpu.vector_store %arg8[%c0_6, %c0_7], %7 {strides = array<i32>} : memref<16x128xf32, #tpu.memory_space<vmem>>, vector<16x128xf32>,
    %c0_i32_8 = arith.constant 0 : i32
    %9 = arith.cmpi eq, %arg2, %c0_i32_8 : i32
    %10 = arith.extui %9 : i1 to i32
    %c0_i32_9 = arith.constant 0 : i32
    %11 = arith.cmpi ne, %10, %c0_i32_9 : i32
    scf.if %11 {
      %c0_10 = arith.constant 0 : index
      %c0_11 = arith.constant 0 : index
      %12 = vector.load %arg5[%c0_10, %c0_11] : memref<16x4xf32, #tpu.memory_space<vmem>>, vector<16x4xf32>
      %c0_12 = arith.constant 0 : index
      %c0_13 = arith.constant 0 : index
      %13 = vector.load %arg6[%c0_12, %c0_13] : memref<4x128xf32, #tpu.memory_space<vmem>>, vector<4x128xf32>
      %c0_14 = arith.constant 0 : index
      %c0_15 = arith.constant 0 : index
      %14 = vector.load %arg7[%c0_14, %c0_15] : memref<1x128xf32, #tpu.memory_space<vmem>>, vector<1x128xf32>
      %15 = vector.extract_strided_slice %12 {offsets = [0, 0], sizes = [16, 1], strides = [1, 1]} : vector<16x4xf32> to vector<16x1xf32>
      %16 = vector.extract_strided_slice %13 {offsets = [0, 0], sizes = [1, 128], strides = [1, 1]} : vector<4x128xf32> to vector<1x128xf32>
      %17 = vector.broadcast %15 : vector<16x1xf32> to vector<16x128xf32>
      %18 = vector.broadcast %16 : vector<1x128xf32> to vector<16x128xf32>
      %19 = arith.mulf %17, %18 : vector<16x128xf32>
      %20 = vector.broadcast %14 : vector<1x128xf32> to vector<16x128xf32>
      %21 = arith.addf %20, %19 : vector<16x128xf32>
      %22 = vector.extract_strided_slice %12 {offsets = [0, 1], sizes = [16, 1], strides = [1, 1]} : vector<16x4xf32> to vector<16x1xf32>
      %23 = vector.extract_strided_slice %13 {offsets = [1, 0], sizes = [1, 128], strides = [1, 1]} : vector<4x128xf32> to vector<1x128xf32>
      %24 = vector.broadcast %22 : vector<16x1xf32> to vector<16x128xf32>
      %25 = vector.broadcast %23 : vector<1x128xf32> to vector<16x128xf32>
      %26 = arith.mulf %24, %25 : vector<16x128xf32>
      %27 = arith.addf %21, %26 : vector<16x128xf32>
      %28 = vector.extract_strided_slice %12 {offsets = [0, 2], sizes = [16, 1], strides = [1, 1]} : vector<16x4xf32> to vector<16x1xf32>
      %29 = vector.extract_strided_slice %13 {offsets = [2, 0], sizes = [1, 128], strides = [1, 1]} : vector<4x128xf32> to vector<1x128xf32>
      %30 = vector.broadcast %28 : vector<16x1xf32> to vector<16x128xf32>
      %31 = vector.broadcast %29 : vector<1x128xf32> to vector<16x128xf32>
      %32 = arith.mulf %30, %31 : vector<16x128xf32>
      %33 = arith.addf %27, %32 : vector<16x128xf32>
      %34 = vector.extract_strided_slice %12 {offsets = [0, 3], sizes = [16, 1], strides = [1, 1]} : vector<16x4xf32> to vector<16x1xf32>
      %35 = vector.extract_strided_slice %13 {offsets = [3, 0], sizes = [1, 128], strides = [1, 1]} : vector<4x128xf32> to vector<1x128xf32>
      %36 = vector.broadcast %34 : vector<16x1xf32> to vector<16x128xf32>
      %37 = vector.broadcast %35 : vector<1x128xf32> to vector<16x128xf32>
      %38 = arith.mulf %36, %37 : vector<16x128xf32>
      %39 = arith.addf %33, %38 : vector<16x128xf32>
      %c0_16 = arith.constant 0 : index
      %c0_17 = arith.constant 0 : index
      %40 = vector.load %arg8[%c0_16, %c0_17] : memref<16x128xf32, #tpu.memory_space<vmem>>, vector<16x128xf32>
      %41 = arith.addf %40, %39 : vector<16x128xf32>
      %c0_18 = arith.constant 0 : index
      %c0_19 = arith.constant 0 : index
      %42 = vector.load %arg8[%c0_18, %c0_19] : memref<16x128xf32, #tpu.memory_space<vmem>>, vector<16x128xf32>
      tpu.vector_store %arg8[%c0_18, %c0_19], %41 {strides = array<i32>} : memref<16x128xf32, #tpu.memory_space<vmem>>, vector<16x128xf32>,
    } else {
    }
    return
  }
  func.func @transform_0(%arg0: i32, %arg1: i32, %arg2: i32) -> (i32, i32) {
    %c0_i32 = arith.constant 0 : i32
    return %arg0, %arg2 : i32, i32
  }
  func.func @transform_1(%arg0: i32, %arg1: i32, %arg2: i32) -> (i32, i32) {
    %c0_i32 = arith.constant 0 : i32
    return %arg2, %arg1 : i32, i32
  }
  func.func @transform_2(%arg0: i32, %arg1: i32, %arg2: i32) -> (i32, i32) {
    %c0_i32 = arith.constant 0 : i32
    %c0_i32_0 = arith.constant 0 : i32
    return %arg0, %c0_i32 : i32, i32
  }
  func.func @transform_3(%arg0: i32, %arg1: i32, %arg2: i32) -> (i32, i32) {
    %c0_i32 = arith.constant 0 : i32
    %c0_i32_0 = arith.constant 0 : i32
    return %c0_i32, %arg1 : i32, i32
  }
  func.func @transform_4(%arg0: i32, %arg1: i32, %arg2: i32) -> (i32, i32) {
    %c0_i32 = arith.constant 0 : i32
    %c0_i32_0 = arith.constant 0 : i32
    return %c0_i32, %arg1 : i32, i32
  }
  func.func @transform_5(%arg0: i32, %arg1: i32, %arg2: i32) -> (i32, i32) {
    %c0_i32 = arith.constant 0 : i32
    return %arg0, %arg1 : i32, i32
  }
}

</mosaic_0001>

<llo_original>
// kernel: lora_linear_apply.1
$region0: #{lora_linear_apply.1}
  #allocation0 [shape = 'u32[]', space=smem, size = 0x4, offset = 0x4, fixed_abs, tag = 'smem constant byte address 0x4 - core index']
  #allocation1 [shape = 'u32[144,128]{1,0:T(1,128)}', space=vmem, size = 0x12000, scoped, tag = 'internal scratch']
  %s0 = inlined_call_operand.vmem [shape: f32[16,128], index: 0, kind: input, shape index: {}]
  %s1 = inlined_call_operand.hbm [shape: f32[128,128], index: 1, kind: input, shape index: {}]
  %s2 = inlined_call_operand.vmem [shape: f32[16,4], index: 2, kind: input, shape index: {}]
  %s3 = inlined_call_operand.vmem [shape: f32[4,128], index: 3, kind: input, shape index: {}]
  %s4 = inlined_call_operand.vmem [shape: f32[1,128], index: 4, kind: input, shape index: {}]
  %s5 = inlined_call_operand.vmem [shape: f32[16,128], index: 5, kind: output, shape index: {}]
  %s6 = sld [smem:[#allocation0]]
  $region42: #{lora_linear_apply.1} parent=0
    _
  %s8 = ssub.s32 1, %s6
  %s9 = scalar_select 0, %s8, %s6
  $region1: #{lora_linear_apply.1} parent=0
    #allocation2 [shape = 'u8[65536]{0}', space=vmem, size = 0x10000, scoped, tag = 'input window, operand 1, single buffered']
    #allocation3 [shape = 's32[1]{0}', space=sflag, size = 0x4, scoped, tag = 'scoped memory for lora_linear_apply.1']
    %10 = vsyncpa [#allocation3], 0
    // Predicated region
    $region2: #{lora_linear_apply.1} parent=1 // pred_check
      _
    $region3: #{lora_linear_apply.1} parent=1 // pred_check_branch
      %12 = sbr.rel (0) target = $region5
    $region4: #{lora_linear_apply.1} parent=1 // pred_region
      _
    $region5: #{lora_linear_apply.1} parent=1 // pred_fallthru
      _
    // Predicated region
    $region6: #{lora_linear_apply.1} parent=1 // pred_check
      _
    $region7: #{lora_linear_apply.1} parent=1 // pred_check_branch
      %14 = sbr.rel (0) target = $region9
    $region8: #{lora_linear_apply.1} parent=1 // pred_region
      %s16 = ssub.s32 2048, 2048
      %17 = vsyncadd [#allocation3], %s16
      %s18 = sshll.u32 [#allocation2], 4
      %s19 = int_to_ptr.vmem [resolvable:$true] %s18
      %24 = dma.hbm_to_vmem [thread:$0]  %s1, 2048, %s19, [#allocation3], 128, 128, 8
    $region9: #{lora_linear_apply.1} parent=1 // pred_fallthru
      _
    // Predicated region
    $region10: #{lora_linear_apply.1} parent=1 // pred_check
      _
    $region11: #{lora_linear_apply.1} parent=1 // pred_check_branch
      %26 = sbr.rel (0) target = $region13
    $region12: #{lora_linear_apply.1} parent=1 // pred_region
      _
    $region13: #{lora_linear_apply.1} parent=1 // pred_fallthru
      _
    // Predicated region
    $region14: #{lora_linear_apply.1} parent=1 // pred_check
      _
    $region15: #{lora_linear_apply.1} parent=1 // pred_check_branch
      %28 = sbr.rel (0) target = $region17
    $region16: #{lora_linear_apply.1} parent=1 // pred_region
      _
    $region17: #{lora_linear_apply.1} parent=1 // pred_fallthru
      _
    // Predicated region
    $region18: #{lora_linear_apply.1} parent=1 // pred_check
      _
    $region19: #{lora_linear_apply.1} parent=1 // pred_check_branch
      %30 = sbr.rel (0) target = $region21
    $region20: #{lora_linear_apply.1} parent=1 // pred_region
      _
    $region21: #{lora_linear_apply.1} parent=1 // pred_fallthru
      _
    // Predicated region
    $region22: #{lora_linear_apply.1} parent=1 // pred_check
      _
    $region23: #{lora_linear_apply.1} parent=1 // pred_check_branch
      %32 = sbr.rel (0) target = $region25
    $region24: #{lora_linear_apply.1} parent=1 // pred_region
      %33 = dma.done [#allocation3], 2048
    $region25: #{lora_linear_apply.1} parent=1 // pred_fallthru
      _
    %p34 = scmp.eq.s32.totalorder 0, 0
    // Predicated region
    $region26: #{lora_linear_apply.1} parent=1 // pred_check
      %p35 = pneg %p34
    $region27: #{lora_linear_apply.1} parent=1 // pred_check_branch
      %37 = sbr.rel (%p35) target = $region29
    $region28: #{lora_linear_apply.1} parent=1 // pred_region
      %38 = vst [vmem:[%s5] sm:$0xff] 0.0
      %39 = vst [vmem:[%s5 + $0x8] sm:$0xff] 0.0
    $region29: #{lora_linear_apply.1} parent=1 // pred_fallthru
      _
    %v40 = vld [vmem:[%s5] sm:$0xff]
    %v41 = vld [vmem:[%s5 + $0x8] sm:$0xff]
    %v42 = vld [vmem:[%s0] sm:$0xff]
    %v43 = vld [vmem:[%s0 + $0x8] sm:$0xff]
    %v44 = vld [vmem:[#allocation2] sm:$0xff]
    %v45 = vld [vmem:[#allocation2 + $0x8] sm:$0xff]
    %v46 = vld [vmem:[#allocation2 + $0x10] sm:$0xff]
    %v47 = vld [vmem:[#allocation2 + $0x18] sm:$0xff]
    %v48 = vld [vmem:[#allocation2 + $0x20] sm:$0xff]
    %v49 = vld [vmem:[#allocation2 + $0x28] sm:$0xff]
    %v50 = vld [vmem:[#allocation2 + $0x30] sm:$0xff]
    %v51 = vld [vmem:[#allocation2 + $0x38] sm:$0xff]
    %v52 = vld [vmem:[#allocation2 + $0x40] sm:$0xff]
    %v53 = vld [vmem:[#allocation2 + $0x48] sm:$0xff]
    %v54 = vld [vmem:[#allocation2 + $0x50] sm:$0xff]
    %v55 = vld [vmem:[#allocation2 + $0x58] sm:$0xff]
    %v56 = vld [vmem:[#allocation2 + $0x60] sm:$0xff]
    %v57 = vld [vmem:[#allocation2 + $0x68] sm:$0xff]
    %v58 = vld [vmem:[#allocation2 + $0x70] sm:$0xff]
    %v59 = vld [vmem:[#allocation2 + $0x78] sm:$0xff]
    %60 = vmatprep.subr.mxu0 0.0
    %61 = vmatpush1.msra.mxu0 %v44
    %62 = vmatprep.subr.mxu0 0.0
    %63 = vmatpush1.msra.mxu0 %v45
    %64 = vmatprep.subr.mxu0 0.0
    %65 = vmatpush1.msra.mxu0 %v46
    %66 = vmatprep.subr.mxu0 0.0
    %67 = vmatpush1.msra.mxu0 %v47
    %68 = vmatprep.subr.mxu0 0.0
    %69 = vmatpush1.msra.mxu0 %v48
    %70 = vmatprep.subr.mxu0 0.0
    %71 = vmatpush1.msra.mxu0 %v49
    %72 = vmatprep.subr.mxu0 0.0
    %73 = vmatpush1.msra.mxu0 %v50
    %74 = vmatprep.subr.mxu0 0.0
    %75 = vmatpush1.msra.mxu0 %v51
    %76 = vmatprep.subr.mxu0 0.0
    %77 = vmatpush1.msra.mxu0 %v52
    %78 = vmatprep.subr.mxu0 0.0
    %79 = vmatpush1.msra.mxu0 %v53
    %80 = vmatprep.subr.mxu0 0.0
    %81 = vmatpush1.msra.mxu0 %v54
    %82 = vmatprep.subr.mxu0 0.0
    %83 = vmatpush1.msra.mxu0 %v55
    %84 = vmatprep.subr.mxu0 0.0
    %85 = vmatpush1.msra.mxu0 %v56
    %86 = vmatprep.subr.mxu0 0.0
    %87 = vmatpush1.msra.mxu0 %v57
    %88 = vmatprep.subr.mxu0 0.0
    %89 = vmatpush1.msra.mxu0 %v58
    %90 = vmatprep.subr.mxu0 0.0
    %91 = vmatpush1.msra.mxu0 %v59
    %92 = vmatprep.subr.mxu0 0.0
    %93 = vmatpush1.msra.mxu0 0.0
    %94 = vmatprep.subr.mxu0 0.0
    %95 = vmatpush1.msra.mxu0 0.0
    %96 = vmatprep.subr.mxu0 0.0
    %97 = vmatpush1.msra.mxu0 0.0
    %98 = vmatprep.subr.mxu0 0.0
    %99 = vmatpush1.msra.mxu0 0.0
    %100 = vmatprep.subr.mxu0 0.0
    %101 = vmatpush1.msra.mxu0 0.0
    %102 = vmatprep.subr.mxu0 0.0
    %103 = vmatpush1.msra.mxu0 0.0
    %104 = vmatprep.subr.mxu0 0.0
    %105 = vmatpush1.msra.mxu0 0.0
    %106 = vmatprep.subr.mxu0 0.0
    %107 = vmatpush1.msra.mxu0 0.0
    %108 = vmatprep.subr.mxu0 0.0
    %109 = vmatpush1.msra.mxu0 0.0
    %110 = vmatprep.subr.mxu0 0.0
    %111 = vmatpush1.msra.mxu0 0.0
    %112 = vmatprep.subr.mxu0 0.0
    %113 = vmatpush1.msra.mxu0 0.0
    %114 = vmatprep.subr.mxu0 0.0
    %115 = vmatpush1.msra.mxu0 0.0
    %116 = vmatprep.subr.mxu0 0.0
    %117 = vmatpush1.msra.mxu0 0.0
    %118 = vmatprep.subr.mxu0 0.0
    %119 = vmatpush1.msra.mxu0 0.0
    %120 = vmatprep.subr.mxu0 0.0
    %121 = vmatpush1.msra.mxu0 0.0
    %122 = vmatprep.subr.mxu0 0.0
    %123 = vmatpush1.msra.mxu0 0.0
    %124 = vmatprep.mubr.f32.mxu0 0.0
    %125 = vmatmul.mubr.f32.gmra.mrb[0].mxu0 %v42
    %v126 = vpop.f32.mrb[0].mxu0
    %v127 = vadd.f32 0.0, %v126
    %v128 = vpop.f32.mrb[0].mxu0
    %129 = vmatprep.mubr.f32.mxu0 0.0
    %130 = vmatmul.mubr.f32.gmra.mrb[0].mxu0 %v43
    %v131 = vpop.f32.mrb[0].mxu0
    %v132 = vadd.f32 0.0, %v131
    %v133 = vpop.f32.mrb[0].mxu0
    %134 = vdwg.mxu0
    %v135 = vadd.f32 %v40, %v127
    %v136 = vadd.f32 %v41, %v132
    %137 = vst [vmem:[%s5] sm:$0xff] %v135
    %138 = vst [vmem:[%s5 + $0x8] sm:$0xff] %v136
    // Predicated region
    $region30: #{lora_linear_apply.1} parent=1 // pred_check
      %p139 = pneg %p34
    $region31: #{lora_linear_apply.1} parent=1 // pred_check_branch
      %141 = sbr.rel (%p139) target = $region33
    $region32: #{lora_linear_apply.1} parent=1 // pred_region
      %v142 = vld [vmem:[%s2] sm:$0xff]
      %v143 = vld [vmem:[%s2 + $0x8] sm:$0xff]
      %v144 = vld [vmem:[%s3] sm:$0xf]
      %v145 = vld [vmem:[%s4] sm:$0x1]
      %147 = vset.pattern.permute.xlu0 0
      %148 = vperm.xlu0 %147, %v142
      %v149 = vpop.permute.xlu0 %148
      %152 = vset.pattern.permute.xlu0 0
      %153 = vperm.xlu0 %152, %v143
      %v154 = vpop.permute.xlu0 %153
      %v156 = vlaneseq
      %v157 = vshrl.u32 %v156, 7
      %v158 = vsub.s32 0, %v157
      %v159 = vrot.slane %v144, %v158
      %v160 = vmul.f32 %v149, %v159
      %v161 = vmul.f32 %v154, %v159
      %v163 = vlaneseq
      %v164 = vshrl.u32 %v163, 7
      %v165 = vsub.s32 0, %v164
      %v166 = vrot.slane %v145, %v165
      %v168 = vadd.f32 %v166, %v160
      %v169 = vadd.f32 %v166, %v161
      %170 = vset.pattern.permute.xlu0 1
      %171 = vperm.xlu0 %170, %v142
      %v172 = vpop.permute.xlu0 %171
      %174 = vset.pattern.permute.xlu0 1
      %175 = vperm.xlu0 %174, %v143
      %v176 = vpop.permute.xlu0 %175
      %v178 = vlaneseq
      %v179 = vshrl.u32 %v178, 7
      %v180 = vsub.s32 1, %v179
      %v181 = vrot.slane %v144, %v180
      %v182 = vmul.f32 %v172, %v181
      %v183 = vmul.f32 %v176, %v181
      %v184 = vadd.f32 %v168, %v182
      %v185 = vadd.f32 %v169, %v183
      %186 = vset.pattern.permute.xlu0 2
      %187 = vperm.xlu0 %186, %v142
      %v188 = vpop.permute.xlu0 %187
      %190 = vset.pattern.permute.xlu0 2
      %191 = vperm.xlu0 %190, %v143
      %v192 = vpop.permute.xlu0 %191
      %v194 = vlaneseq
      %v195 = vshrl.u32 %v194, 7
      %v196 = vsub.s32 2, %v195
      %v197 = vrot.slane %v144, %v196
      %v198 = vmul.f32 %v188, %v197
      %v199 = vmul.f32 %v192, %v197
      %v200 = vadd.f32 %v184, %v198
      %v201 = vadd.f32 %v185, %v199
      %202 = vset.pattern.permute.xlu0 3
      %203 = vperm.xlu0 %202, %v142
      %v204 = vpop.permute.xlu0 %203
      %206 = vset.pattern.permute.xlu0 3
      %207 = vperm.xlu0 %206, %v143
      %v208 = vpop.permute.xlu0 %207
      %v210 = vlaneseq
      %v211 = vshrl.u32 %v210, 7
      %v212 = vsub.s32 3, %v211
      %v213 = vrot.slane %v144, %v212
      %v214 = vmul.f32 %v204, %v213
      %v215 = vmul.f32 %v208, %v213
      %v216 = vadd.f32 %v200, %v214
      %v217 = vadd.f32 %v201, %v215
      %v218 = vld [vmem:[%s5] sm:$0xff]
      %v219 = vld [vmem:[%s5 + $0x8] sm:$0xff]
      %v220 = vadd.f32 %v218, %v216
      %v221 = vadd.f32 %v219, %v217
      %222 = vst [vmem:[%s5] sm:$0xff] %v220
      %223 = vst [vmem:[%s5 + $0x8] sm:$0xff] %v221
    $region33: #{lora_linear_apply.1} parent=1 // pred_fallthru
      _
    // Predicated region
    $region34: #{lora_linear_apply.1} parent=1 // pred_check
      _
    $region35: #{lora_linear_apply.1} parent=1 // pred_check_branch
      %225 = sbr.rel (0) target = $region37
    $region36: #{lora_linear_apply.1} parent=1 // pred_region
      _
    $region37: #{lora_linear_apply.1} parent=1 // pred_fallthru
      _
    // Predicated region
    $region38: #{lora_linear_apply.1} parent=1 // pred_check
      _
    $region39: #{lora_linear_apply.1} parent=1 // pred_check_branch
      %227 = sbr.rel (0) target = $region41
    $region40: #{lora_linear_apply.1} parent=1 // pred_region
      _
    $region41: #{lora_linear_apply.1} parent=1 // pred_fallthru
      _
    %228 = vsyncpa [#allocation3], 1

</llo_original>
